<compile_context>
chip_gen: v6e
topology: v6e:2x2x1
jax: 0.10.0
libtpu: 0.0.40
codegen_flags: <defaults>
</compile_context>

<pallas_src>
import jax
import jax.numpy as jnp
from jax.experimental import pallas as pl
from jax.experimental.pallas import tpu as pltpu


def _round_up(x, m):
    return ((x + m - 1) // m) * m


def resblock_kernel(x_ref, w1_ref, b1_ref, w2_ref, b2_ref, o_ref):
    # Entire hot path (two matmuls, two ReLUs, bias adds, residual) in one kernel body.
    mxu_dtype = w1_ref.dtype  # bf16 by default
    h = jnp.maximum(x_ref[...], 0.0).astype(mxu_dtype)               # ReLU(x) -> MXU dtype
    h = jnp.dot(h, w1_ref[...], preferred_element_type=jnp.float32)  # Linear 1 (MXU, f32 acc)
    h = jnp.maximum(h + b1_ref[...], 0.0).astype(mxu_dtype)          # bias + ReLU -> MXU dtype
    h = jnp.dot(h, w2_ref[...], preferred_element_type=jnp.float32)  # Linear 2 (MXU, f32 acc)
    # Re-read x only now for the residual (keeps its live range short).
    o_ref[...] = (h + b2_ref[...] + x_ref[...]).astype(o_ref.dtype)


def prepare_params(w1, b1, w2, b2, *, compute_dtype=jnp.bfloat16):
    """One-time, hoistable padding (feature dim -> multiple of 128) + cast of MXU operands.

    Zero padding is exact: ReLU(0) = 0 and zero weight rows/cols contribute nothing.
    Biases stay f32 (added after the f32 accumulation).
    """
    F = w1.shape[0]
    assert w1.shape == (F, F) and w2.shape == (F, F), \
        "ResBlock requires in_features == out_features for the residual add"
    Fp = _round_up(F, 128)

    def pad_w(w):
        if w.shape == (Fp, Fp) and w.dtype == compute_dtype:
            return w
        return (jnp.zeros((Fp, Fp), compute_dtype)
                .at[: w.shape[0], : w.shape[1]].set(w.astype(compute_dtype)))

    def pad_b(b):
        b = b.reshape(1, -1).astype(jnp.float32)
        if b.shape == (1, Fp):
            return b
        return jnp.zeros((1, Fp), jnp.float32).at[:, : b.shape[1]].set(b)

    return pad_w(w1), pad_b(b1), pad_w(w2), pad_b(b2)


def resblock(x, w1, b1, w2, b2, *, bm=None, compute_dtype=jnp.bfloat16):
    B, F_in = x.shape
    Fp = _round_up(F_in, 128)

    # No-op if the params were already run through prepare_params().
    w1_p, b1_p, w2_p, b2_p = prepare_params(w1, b1, w2, b2, compute_dtype=compute_dtype)
    assert w1_p.shape == (Fp, Fp) and w2_p.shape == (Fp, Fp)

    # Batch tile: padding-aware choice.
    #  - B <= 256: a single tile of round_up(B, 8) rows (no dead-row waste).
    #  - otherwise pick from {1024, 512, 256} minimizing padded dead rows (tie -> larger
    #    tile for better per-step-overhead amortization / MXU M-fill).
    if bm is None:
        if B <= 256:
            bm = _round_up(B, 8)
        else:
            bm, best_waste = 256, None
            for cand in (1024, 512, 256):
                waste = _round_up(B, cand) - B
                if best_waste is None or waste < best_waste:
                    bm, best_waste = cand, waste
    Bp = _round_up(B, bm)

    # Per-call x padding (bit-exact for the real rows/lanes).
    if (Bp, Fp) != (B, F_in):
        x_p = jnp.zeros((Bp, Fp), x.dtype).at[:B, :F_in].set(x)
    else:
        x_p = x

    grid = (Bp // bm,)

    # Resident operands (constant index_map): single buffer, no pointless double-buffering.
    resident = dict(pipeline_mode=pl.Buffered(1))
    in_specs = [
        pl.BlockSpec((bm, Fp), lambda i: (i, 0)),              # x tile over batch
        pl.BlockSpec((Fp, Fp), lambda i: (0, 0), **resident),  # W1 (bf16, resident)
        pl.BlockSpec((1, Fp), lambda i: (0, 0), **resident),   # b1 (f32)
        pl.BlockSpec((Fp, Fp), lambda i: (0, 0), **resident),  # W2 (bf16, resident)
        pl.BlockSpec((1, Fp), lambda i: (0, 0), **resident),   # b2 (f32)
    ]

    # VMEM budget: double-buffered x/out tiles + single-buffered bf16 weights + biases
    # + headroom for the f32 intermediates, capped per-generation from the real VMEM size.
    xb = jnp.dtype(x.dtype).itemsize
    wb = jnp.dtype(compute_dtype).itemsize
    tile_bytes = bm * Fp * xb
    needed = (
        2 * tile_bytes          # x tiles (double-buffered)
        + 2 * tile_bytes        # out tiles (double-buffered)
        + 2 * Fp * Fp * wb      # W1 + W2 (Buffered(1))
        + 2 * 8 * Fp * 4        # biases (sublane-padded)
        + 4 * bm * Fp * 4       # f32 intermediates / compiler internal scratch headroom
    )
    try:
        vmem_cap = int(getattr(pltpu.get_tpu_info(), "vmem_capacity_bytes", 64 << 20))
    except Exception:
        vmem_cap = 64 << 20
    vmem_limit = int(min(max(2 * needed, 32 << 20), (vmem_cap * 3) // 4))
    # TODO(synk): for very large F (>= ~1536 f32-equivalent) on v7x's 64 MiB VMEM, switch to
    # an output-feature grid axis with K-tiled W2 + accumulator instead of resident weights.

    cost = pl.CostEstimate(
        flops=2 * 2 * Bp * Fp * Fp,                                   # two (Bp,Fp)x(Fp,Fp) matmuls
        transcendentals=0,
        bytes_accessed=2 * Bp * Fp * xb + 2 * Fp * Fp * wb + 2 * Fp * 4,
    )

    out_p = pl.pallas_call(
        resblock_kernel,
        out_shape=jax.ShapeDtypeStruct((Bp, Fp), x.dtype),
        grid_spec=pltpu.PrefetchScalarGridSpec(
            num_scalar_prefetch=0,
            grid=grid,
            in_specs=in_specs,
            out_specs=pl.BlockSpec((bm, Fp), lambda i: (i, 0)),
        ),
        compiler_params=pltpu.CompilerParams(
            dimension_semantics=("parallel",),
            vmem_limit_bytes=vmem_limit,
        ),
        cost_estimate=cost,
    )(x_p, w1_p, b1_p, w2_p, b2_p)

    if (Bp, Fp) != (B, F_in):
        return out_p[:B, :F_in]
    return out_p


def resblock_ref(x, w1, b1, w2, b2):
    h = jnp.maximum(x, 0.0)
    h = h @ w1 + b1.reshape(1, -1)
    h = jnp.maximum(h, 0.0)
    h = h @ w2 + b2.reshape(1, -1)
    return h + x


def _make_params(key, F):
    kw1, kb1, kw2, kb2 = jax.random.split(key, 4)
    bound = 1.0 / jnp.sqrt(F)
    w1 = jax.random.uniform(kw1, (F, F), minval=-bound, maxval=bound, dtype=jnp.float32)
    b1 = jax.random.uniform(kb1, (1, F), minval=-bound, maxval=bound, dtype=jnp.float32)
    w2 = jax.random.uniform(kw2, (F, F), minval=-bound, maxval=bound, dtype=jnp.float32)
    b2 = jax.random.uniform(kb2, (1, F), minval=-bound, maxval=bound, dtype=jnp.float32)
    return w1, b1, w2, b2


if __name__ == "__main__":
    key = jax.random.PRNGKey(0)
    k1, k2, k3, k4 = jax.random.split(key, 4)

    # Case 1: small shapes consistent with the module (in_features == out_features).
    # Params are prepared (padded + bf16-cast) once, outside the per-call path.
    B, F = 8, 32
    x = jax.random.normal(k1, (B, F), dtype=jnp.float32)
    w1, b1, w2, b2 = _make_params(k2, F)
    w1p, b1p, w2p, b2p = prepare_params(w1, b1, w2, b2)
    out = jax.block_until_ready(resblock(x, w1p, b1p, w2p, b2p))
    ref = resblock_ref(x, w1, b1, w2, b2)
    assert out.shape == (B, F)
    # bf16 MXU operands (f32 accumulation) -> slightly relaxed tolerance vs f32 reference.
    assert jnp.allclose(out, ref, atol=3e-2, rtol=3e-2), "mismatch vs reference (8x32)"

    # Case 2: ragged / non-aligned shapes exercise the zero-padding path with raw params.
    B2, F2 = 37, 48
    x2 = jax.random.normal(k3, (B2, F2), dtype=jnp.float32)
    w1b, b1b, w2b, b2b = _make_params(k4, F2)
    out2 = jax.block_until_ready(resblock(x2, w1b, b1b, w2b, b2b))
    ref2 = resblock_ref(x2, w1b, b1b, w2b, b2b)
    assert out2.shape == (B2, F2)
    assert jnp.allclose(out2, ref2, atol=3e-2, rtol=3e-2), "mismatch vs reference (37x48)"

    print("KERNEL_OK")
</pallas_src>

<mosaic_0001>
module attributes {stable_mosaic.version = 11 : i64} {
  func.func @resblock_kernel(%arg0: i32, %arg1: memref<8x128xf32, #tpu.memory_space<vmem>>, %arg2: memref<128x128xbf16, #tpu.memory_space<vmem>>, %arg3: memref<1x128xf32, #tpu.memory_space<vmem>>, %arg4: memref<128x128xbf16, #tpu.memory_space<vmem>>, %arg5: memref<1x128xf32, #tpu.memory_space<vmem>>, %arg6: memref<8x128xf32, #tpu.memory_space<vmem>>) attributes {dimension_semantics = [#tpu.dimension_semantics<parallel>], iteration_bounds = array<i64: 1>, scalar_prefetch = 0 : i64, scratch_operands = 0 : i64, tpu.core_type = #tpu.core_type<tc>, window_params = [{transform_indices = @transform_0, window_bounds = array<i64: 8, 128>}, {pipeline_mode = #tpu.pipeline_mode<synchronous>, transform_indices = @transform_1, window_bounds = array<i64: 128, 128>}, {pipeline_mode = #tpu.pipeline_mode<synchronous>, transform_indices = @transform_2, window_bounds = array<i64: 1, 128>}, {pipeline_mode = #tpu.pipeline_mode<synchronous>, transform_indices = @transform_3, window_bounds = array<i64: 128, 128>}, {pipeline_mode = #tpu.pipeline_mode<synchronous>, transform_indices = @transform_4, window_bounds = array<i64: 1, 128>}, {transform_indices = @transform_5, window_bounds = array<i64: 8, 128>}]} {
    %c0 = arith.constant 0 : index
    %c0_0 = arith.constant 0 : index
    %0 = vector.load %arg1[%c0, %c0_0] : memref<8x128xf32, #tpu.memory_space<vmem>>, vector<8x128xf32>
    %cst = arith.constant 0.000000e+00 : f32
    %1 = vector.broadcast %cst : f32 to vector<8x128xf32>
    %2 = arith.maximumf %0, %1 : vector<8x128xf32>
    %3 = arith.truncf %2 : vector<8x128xf32> to vector<8x128xbf16>
    %c0_1 = arith.constant 0 : index
    %c0_2 = arith.constant 0 : index
    %4 = vector.load %arg2[%c0_1, %c0_2] : memref<128x128xbf16, #tpu.memory_space<vmem>>, vector<128x128xbf16>
    %cst_3 = arith.constant dense<0.000000e+00> : vector<8x128xf32>
    %5 = tpu.matmul %3, %4, %cst_3 {dimension_numbers = #tpu.dot_dimension_numbers<[1], [0], [0], [1], [0, 0, 1, 1], [], []>} : vector<8x128xbf16>, vector<128x128xbf16>, vector<8x128xf32> -> vector<8x128xf32>
    %c0_4 = arith.constant 0 : index
    %c0_5 = arith.constant 0 : index
    %6 = vector.load %arg3[%c0_4, %c0_5] : memref<1x128xf32, #tpu.memory_space<vmem>>, vector<1x128xf32>
    %7 = vector.broadcast %6 : vector<1x128xf32> to vector<8x128xf32>
    %8 = arith.addf %5, %7 : vector<8x128xf32>
    %cst_6 = arith.constant 0.000000e+00 : f32
    %9 = vector.broadcast %cst_6 : f32 to vector<8x128xf32>
    %10 = arith.maximumf %8, %9 : vector<8x128xf32>
    %11 = arith.truncf %10 : vector<8x128xf32> to vector<8x128xbf16>
    %c0_7 = arith.constant 0 : index
    %c0_8 = arith.constant 0 : index
    %12 = vector.load %arg4[%c0_7, %c0_8] : memref<128x128xbf16, #tpu.memory_space<vmem>>, vector<128x128xbf16>
    %cst_9 = arith.constant dense<0.000000e+00> : vector<8x128xf32>
    %13 = tpu.matmul %11, %12, %cst_9 {dimension_numbers = #tpu.dot_dimension_numbers<[1], [0], [0], [1], [0, 0, 1, 1], [], []>} : vector<8x128xbf16>, vector<128x128xbf16>, vector<8x128xf32> -> vector<8x128xf32>
    %c0_10 = arith.constant 0 : index
    %c0_11 = arith.constant 0 : index
    %14 = vector.load %arg5[%c0_10, %c0_11] : memref<1x128xf32, #tpu.memory_space<vmem>>, vector<1x128xf32>
    %15 = vector.broadcast %14 : vector<1x128xf32> to vector<8x128xf32>
    %16 = arith.addf %13, %15 : vector<8x128xf32>
    %c0_12 = arith.constant 0 : index
    %c0_13 = arith.constant 0 : index
    %17 = vector.load %arg1[%c0_12, %c0_13] : memref<8x128xf32, #tpu.memory_space<vmem>>, vector<8x128xf32>
    %18 = arith.addf %16, %17 : vector<8x128xf32>
    %c0_14 = arith.constant 0 : index
    %c0_15 = arith.constant 0 : index
    %19 = vector.load %arg6[%c0_14, %c0_15] : memref<8x128xf32, #tpu.memory_space<vmem>>, vector<8x128xf32>
    tpu.vector_store %arg6[%c0_14, %c0_15], %18 {strides = array<i32>} : memref<8x128xf32, #tpu.memory_space<vmem>>, vector<8x128xf32>,
    return
  }
  func.func @transform_0(%arg0: i32) -> (i32, i32) {
    %c0_i32 = arith.constant 0 : i32
    %c0_i32_0 = arith.constant 0 : i32
    return %arg0, %c0_i32 : i32, i32
  }
  func.func @transform_1(%arg0: i32) -> (i32, i32) {
    %c0_i32 = arith.constant 0 : i32
    %c0_i32_0 = arith.constant 0 : i32
    %c0_i32_1 = arith.constant 0 : i32
    return %c0_i32, %c0_i32_0 : i32, i32
  }
  func.func @transform_2(%arg0: i32) -> (i32, i32) {
    %c0_i32 = arith.constant 0 : i32
    %c0_i32_0 = arith.constant 0 : i32
    %c0_i32_1 = arith.constant 0 : i32
    return %c0_i32, %c0_i32_0 : i32, i32
  }
  func.func @transform_3(%arg0: i32) -> (i32, i32) {
    %c0_i32 = arith.constant 0 : i32
    %c0_i32_0 = arith.constant 0 : i32
    %c0_i32_1 = arith.constant 0 : i32
    return %c0_i32, %c0_i32_0 : i32, i32
  }
  func.func @transform_4(%arg0: i32) -> (i32, i32) {
    %c0_i32 = arith.constant 0 : i32
    %c0_i32_0 = arith.constant 0 : i32
    %c0_i32_1 = arith.constant 0 : i32
    return %c0_i32, %c0_i32_0 : i32, i32
  }
  func.func @transform_5(%arg0: i32) -> (i32, i32) {
    %c0_i32 = arith.constant 0 : i32
    %c0_i32_0 = arith.constant 0 : i32
    return %arg0, %c0_i32 : i32, i32
  }
}

</mosaic_0001>

<llo_original>
// kernel: tpu_custom_call.1
$region0: #{tpu_custom_call.1}
  #allocation0 [shape = 'u32[]', space=smem, size = 0x4, offset = 0x4, fixed_abs, tag = 'smem constant byte address 0x4 - core index']
  #allocation1 [shape = 'u32[144,128]{1,0:T(1,128)}', space=vmem, size = 0x12000, scoped, tag = 'internal scratch']
  %s0 = inlined_call_operand.hbm [shape: f32[8,128], index: 0, kind: input, shape index: {}]
  %s1 = inlined_call_operand.hbm [shape: bf16[128,128], index: 1, kind: input, shape index: {}]
  %s2 = inlined_call_operand.vmem [shape: f32[1,128], index: 2, kind: input, shape index: {}]
  %s3 = inlined_call_operand.hbm [shape: bf16[128,128], index: 3, kind: input, shape index: {}]
  %s4 = inlined_call_operand.vmem [shape: f32[1,128], index: 4, kind: input, shape index: {}]
  %s5 = inlined_call_operand.hbm [shape: f32[8,128], index: 5, kind: output, shape index: {}]
  %s6 = sld [smem:[#allocation0]]
  $region42: #{tpu_custom_call.1} parent=0
    _
  %s8 = ssub.s32 1, %s6
  %s9 = scalar_select 0, %s8, %s6
  $region1: #{tpu_custom_call.1} parent=0
    #allocation2 [shape = 'u8[4096]{0}', space=vmem, size = 0x1000, scoped, tag = 'input window, operand 0, single buffered']
    #allocation3 [shape = 's32[1]{0}', space=sflag, size = 0x4, scoped, tag = 'scoped memory for tpu_custom_call.1']
    #allocation4 [shape = 's32[1]{0}', space=sflag, size = 0x4, scoped, tag = 'scoped memory for tpu_custom_call.1']
    #allocation5 [shape = 'u8[32768]{0}', space=vmem, size = 0x8000, scoped, tag = 'input window, operand 1, single buffered']
    #allocation6 [shape = 's32[1]{0}', space=sflag, size = 0x4, scoped, tag = 'scoped memory for tpu_custom_call.1']
    #allocation7 [shape = 'u8[32768]{0}', space=vmem, size = 0x8000, scoped, tag = 'input window, operand 3, single buffered']
    #allocation8 [shape = 'u8[4096]{0}', space=vmem, size = 0x1000, scoped, tag = 'output window, operand 0, single buffered']
    %10 = vsyncpa [#allocation3], 0
    %11 = vsyncpa [#allocation6], 0
    %12 = vsyncpa [#allocation4], 0
    // Predicated region
    $region2: #{tpu_custom_call.1} parent=1 // pred_check
      _
    $region3: #{tpu_custom_call.1} parent=1 // pred_check_branch
      %14 = sbr.rel (0) target = $region5
    $region4: #{tpu_custom_call.1} parent=1 // pred_region
      %s16 = ssub.s32 128, 128
      %17 = vsyncadd [#allocation3], %s16
      %s19 = sshll.u32 [#allocation2], 4
      %s20 = int_to_ptr.vmem [resolvable:$true] %s19
      %22 = dma.hbm_to_vmem [thread:$0]  %s0, 128, %s20, [#allocation3]
    $region5: #{tpu_custom_call.1} parent=1 // pred_fallthru
      _
    // Predicated region
    $region6: #{tpu_custom_call.1} parent=1 // pred_check
      _
    $region7: #{tpu_custom_call.1} parent=1 // pred_check_branch
      %24 = sbr.rel (0) target = $region9
    $region8: #{tpu_custom_call.1} parent=1 // pred_region
      %s26 = ssub.s32 1024, 1024
      %27 = vsyncadd [#allocation6], %s26
      %s28 = sshll.u32 [#allocation5], 4
      %s29 = int_to_ptr.vmem [resolvable:$true] %s28
      %34 = dma.hbm_to_vmem [thread:$0]  %s1, 1024, %s29, [#allocation6], 64, 64, 4
    $region9: #{tpu_custom_call.1} parent=1 // pred_fallthru
      _
    // Predicated region
    $region10: #{tpu_custom_call.1} parent=1 // pred_check
      _
    $region11: #{tpu_custom_call.1} parent=1 // pred_check_branch
      %36 = sbr.rel (0) target = $region13
    $region12: #{tpu_custom_call.1} parent=1 // pred_region
      _
    $region13: #{tpu_custom_call.1} parent=1 // pred_fallthru
      _
    // Predicated region
    $region14: #{tpu_custom_call.1} parent=1 // pred_check
      _
    $region15: #{tpu_custom_call.1} parent=1 // pred_check_branch
      %38 = sbr.rel (0) target = $region17
    $region16: #{tpu_custom_call.1} parent=1 // pred_region
      %s40 = ssub.s32 1024, 1024
      %41 = vsyncadd [#allocation6], %s40
      %s42 = sshll.u32 [#allocation7], 4
      %s43 = int_to_ptr.vmem [resolvable:$true] %s42
      %48 = dma.hbm_to_vmem [thread:$0]  %s3, 1024, %s43, [#allocation6], 64, 64, 4
    $region17: #{tpu_custom_call.1} parent=1 // pred_fallthru
      _
    // Predicated region
    $region18: #{tpu_custom_call.1} parent=1 // pred_check
      _
    $region19: #{tpu_custom_call.1} parent=1 // pred_check_branch
      %50 = sbr.rel (0) target = $region21
    $region20: #{tpu_custom_call.1} parent=1 // pred_region
      _
    $region21: #{tpu_custom_call.1} parent=1 // pred_fallthru
      _
    // Predicated region
    $region22: #{tpu_custom_call.1} parent=1 // pred_check
      _
    $region23: #{tpu_custom_call.1} parent=1 // pred_check_branch
      %52 = sbr.rel (0) target = $region25
    $region24: #{tpu_custom_call.1} parent=1 // pred_region
      %53 = dma.done [#allocation3], 128
    $region25: #{tpu_custom_call.1} parent=1 // pred_fallthru
      _
    // Predicated region
    $region26: #{tpu_custom_call.1} parent=1 // pred_check
      _
    $region27: #{tpu_custom_call.1} parent=1 // pred_check_branch
      %55 = sbr.rel (0) target = $region29
    $region28: #{tpu_custom_call.1} parent=1 // pred_region
      %56 = dma.done [#allocation6], 1024
    $region29: #{tpu_custom_call.1} parent=1 // pred_fallthru
      _
    // Predicated region
    $region30: #{tpu_custom_call.1} parent=1 // pred_check
      _
    $region31: #{tpu_custom_call.1} parent=1 // pred_check_branch
      %58 = sbr.rel (0) target = $region33
    $region32: #{tpu_custom_call.1} parent=1 // pred_region
      %59 = dma.done [#allocation6], 1024
    $region33: #{tpu_custom_call.1} parent=1 // pred_fallthru
      _
    %v61 = vld [vmem:[#allocation2] sm:$0xff]
    %v62 = vmax.f32 %v61, 0.0
    %v63 = vpack.c.bf16 %v62, %v62
    %v64 = vld [vmem:[#allocation5] sm:$0xf]
    %v65 = vld [vmem:[#allocation5 + $0x4] sm:$0xf]
    %v66 = vld [vmem:[#allocation5 + $0x8] sm:$0xf]
    %v67 = vld [vmem:[#allocation5 + $0xc] sm:$0xf]
    %v68 = vld [vmem:[#allocation5 + $0x10] sm:$0xf]
    %v69 = vld [vmem:[#allocation5 + $0x14] sm:$0xf]
    %v70 = vld [vmem:[#allocation5 + $0x18] sm:$0xf]
    %v71 = vld [vmem:[#allocation5 + $0x1c] sm:$0xf]
    %v72 = vld [vmem:[#allocation5 + $0x20] sm:$0xf]
    %v73 = vld [vmem:[#allocation5 + $0x24] sm:$0xf]
    %v74 = vld [vmem:[#allocation5 + $0x28] sm:$0xf]
    %v75 = vld [vmem:[#allocation5 + $0x2c] sm:$0xf]
    %v76 = vld [vmem:[#allocation5 + $0x30] sm:$0xf]
    %v77 = vld [vmem:[#allocation5 + $0x34] sm:$0xf]
    %v78 = vld [vmem:[#allocation5 + $0x38] sm:$0xf]
    %v79 = vld [vmem:[#allocation5 + $0x3c] sm:$0xf]
    %v80 = vld [vmem:[%s2] sm:$0x1]
    %v82 = vlaneseq
    %v83 = vshrl.u32 %v82, 7
    %v84 = vsub.s32 0, %v83
    %v85 = vrot.slane %v80, %v84
    %v103 = vunpack.c.l.b16 %v64
    %v104 = vunpack.c.l.b16 %v65
    %v105 = vunpack.c.l.b16 %v66
    %v106 = vunpack.c.l.b16 %v67
    %v107 = vunpack.c.l.b16 %v68
    %v108 = vunpack.c.l.b16 %v69
    %v109 = vunpack.c.l.b16 %v70
    %v110 = vunpack.c.l.b16 %v71
    %v111 = vunpack.c.l.b16 %v72
    %v112 = vunpack.c.l.b16 %v73
    %v113 = vunpack.c.l.b16 %v74
    %v114 = vunpack.c.l.b16 %v75
    %v115 = vunpack.c.l.b16 %v76
    %v116 = vunpack.c.l.b16 %v77
    %v117 = vunpack.c.l.b16 %v78
    %v118 = vunpack.c.l.b16 %v79
    %v119 = vpack.c.b16 %v104, %v103
    %v120 = vpack.c.b16 %v106, %v105
    %v121 = vpack.c.b16 %v108, %v107
    %v122 = vpack.c.b16 %v110, %v109
    %v123 = vpack.c.b16 %v112, %v111
    %v124 = vpack.c.b16 %v114, %v113
    %v125 = vpack.c.b16 %v116, %v115
    %v126 = vpack.c.b16 %v118, %v117
    %135 = vmatprep.subr.bf16.mxu0 0
    %136 = vmatpush1.bf16.msra.mxu0 %v126
    %137 = vmatprep.subr.bf16.mxu0 0
    %138 = vmatpush1.bf16.msra.mxu0 %v125
    %139 = vmatprep.subr.bf16.mxu0 0
    %140 = vmatpush1.bf16.msra.mxu0 %v124
    %141 = vmatprep.subr.bf16.mxu0 0
    %142 = vmatpush1.bf16.msra.mxu0 %v123
    %143 = vmatprep.subr.bf16.mxu0 0
    %144 = vmatpush1.bf16.msra.mxu0 %v122
    %145 = vmatprep.subr.bf16.mxu0 0
    %146 = vmatpush1.bf16.msra.mxu0 %v121
    %147 = vmatprep.subr.bf16.mxu0 0
    %148 = vmatpush1.bf16.msra.mxu0 %v120
    %149 = vmatprep.subr.bf16.mxu0 0
    %150 = vmatpush1.bf16.msra.mxu0 %v119
    %151 = vmatprep.subr.bf16.mxu0 0
    %152 = vmatpush2.bf16.msra.mxu0 0
    %153 = vmatprep.subr.bf16.mxu0 0
    %154 = vmatpush2.bf16.msra.mxu0 0
    %155 = vmatprep.subr.bf16.mxu0 0
    %156 = vmatpush2.bf16.msra.mxu0 0
    %157 = vmatprep.subr.bf16.mxu0 0
    %158 = vmatpush2.bf16.msra.mxu0 0
    %159 = vmatprep.subr.bf16.mxu0 0
    %160 = vmatpush2.bf16.msra.mxu0 0
    %161 = vmatprep.subr.bf16.mxu0 0
    %162 = vmatpush2.bf16.msra.mxu0 0
    %163 = vmatprep.subr.bf16.mxu0 0
    %164 = vmatpush2.bf16.msra.mxu0 0
    %165 = vmatprep.subr.bf16.mxu0 0
    %166 = vmatpush2.bf16.msra.mxu0 0
    %167 = vmatprep.mubr.bf16.mxu0 0
    %168 = vmatmul.mubr.bf16.gmra.mxu0 %v63
    %v169 = vpop.f32.mrf.mxu0
    %v170 = vadd.f32 %v85, %v169
    %v171 = vpop.f32.mrf.mxu0
    %v172 = vpop.f32.mrf.mxu0
    %v173 = vpop.f32.mrf.mxu0
    %174 = vdwg.mxu0
    %v175 = vmax.f32 %v170, 0.0
    %v176 = vpack.c.bf16 %v175, %v175
    %v177 = vld [vmem:[#allocation7] sm:$0xf]
    %v178 = vld [vmem:[#allocation7 + $0x4] sm:$0xf]
    %v179 = vld [vmem:[#allocation7 + $0x8] sm:$0xf]
    %v180 = vld [vmem:[#allocation7 + $0xc] sm:$0xf]
    %v181 = vld [vmem:[#allocation7 + $0x10] sm:$0xf]
    %v182 = vld [vmem:[#allocation7 + $0x14] sm:$0xf]
    %v183 = vld [vmem:[#allocation7 + $0x18] sm:$0xf]
    %v184 = vld [vmem:[#allocation7 + $0x1c] sm:$0xf]
    %v185 = vld [vmem:[#allocation7 + $0x20] sm:$0xf]
    %v186 = vld [vmem:[#allocation7 + $0x24] sm:$0xf]
    %v187 = vld [vmem:[#allocation7 + $0x28] sm:$0xf]
    %v188 = vld [vmem:[#allocation7 + $0x2c] sm:$0xf]
    %v189 = vld [vmem:[#allocation7 + $0x30] sm:$0xf]
    %v190 = vld [vmem:[#allocation7 + $0x34] sm:$0xf]
    %v191 = vld [vmem:[#allocation7 + $0x38] sm:$0xf]
    %v192 = vld [vmem:[#allocation7 + $0x3c] sm:$0xf]
    %v193 = vld [vmem:[%s4] sm:$0x1]
    %v195 = vlaneseq
    %v196 = vshrl.u32 %v195, 7
    %v197 = vsub.s32 0, %v196
    %v198 = vrot.slane %v193, %v197
    %v216 = vunpack.c.l.b16 %v177
    %v217 = vunpack.c.l.b16 %v178
    %v218 = vunpack.c.l.b16 %v179
    %v219 = vunpack.c.l.b16 %v180
    %v220 = vunpack.c.l.b16 %v181
    %v221 = vunpack.c.l.b16 %v182
    %v222 = vunpack.c.l.b16 %v183
    %v223 = vunpack.c.l.b16 %v184
    %v224 = vunpack.c.l.b16 %v185
    %v225 = vunpack.c.l.b16 %v186
    %v226 = vunpack.c.l.b16 %v187
    %v227 = vunpack.c.l.b16 %v188
    %v228 = vunpack.c.l.b16 %v189
    %v229 = vunpack.c.l.b16 %v190
    %v230 = vunpack.c.l.b16 %v191
    %v231 = vunpack.c.l.b16 %v192
    %v232 = vpack.c.b16 %v217, %v216
    %v233 = vpack.c.b16 %v219, %v218
    %v234 = vpack.c.b16 %v221, %v220
    %v235 = vpack.c.b16 %v223, %v222
    %v236 = vpack.c.b16 %v225, %v224
    %v237 = vpack.c.b16 %v227, %v226
    %v238 = vpack.c.b16 %v229, %v228
    %v239 = vpack.c.b16 %v231, %v230
    %248 = vmatprep.subr.bf16.mxu0 0
    %249 = vmatpush1.bf16.msra.mxu0 %v239
    %250 = vmatprep.subr.bf16.mxu0 0
    %251 = vmatpush1.bf16.msra.mxu0 %v238
    %252 = vmatprep.subr.bf16.mxu0 0
    %253 = vmatpush1.bf16.msra.mxu0 %v237
    %254 = vmatprep.subr.bf16.mxu0 0
    %255 = vmatpush1.bf16.msra.mxu0 %v236
    %256 = vmatprep.subr.bf16.mxu0 0
    %257 = vmatpush1.bf16.msra.mxu0 %v235
    %258 = vmatprep.subr.bf16.mxu0 0
    %259 = vmatpush1.bf16.msra.mxu0 %v234
    %260 = vmatprep.subr.bf16.mxu0 0
    %261 = vmatpush1.bf16.msra.mxu0 %v233
    %262 = vmatprep.subr.bf16.mxu0 0
    %263 = vmatpush1.bf16.msra.mxu0 %v232
    %264 = vmatprep.subr.bf16.mxu0 0
    %265 = vmatpush2.bf16.msra.mxu0 0
    %266 = vmatprep.subr.bf16.mxu0 0
    %267 = vmatpush2.bf16.msra.mxu0 0
    %268 = vmatprep.subr.bf16.mxu0 0
    %269 = vmatpush2.bf16.msra.mxu0 0
    %270 = vmatprep.subr.bf16.mxu0 0
    %271 = vmatpush2.bf16.msra.mxu0 0
    %272 = vmatprep.subr.bf16.mxu0 0
    %273 = vmatpush2.bf16.msra.mxu0 0
    %274 = vmatprep.subr.bf16.mxu0 0
    %275 = vmatpush2.bf16.msra.mxu0 0
    %276 = vmatprep.subr.bf16.mxu0 0
    %277 = vmatpush2.bf16.msra.mxu0 0
    %278 = vmatprep.subr.bf16.mxu0 0
    %279 = vmatpush2.bf16.msra.mxu0 0
    %280 = vmatprep.mubr.bf16.mxu0 0
    %281 = vmatmul.mubr.bf16.gmra.mxu0 %v176
    %v282 = vpop.f32.mrf.mxu0
    %v283 = vadd.f32 %v198, %v282
    %v284 = vpop.f32.mrf.mxu0
    %v285 = vpop.f32.mrf.mxu0
    %v286 = vpop.f32.mrf.mxu0
    %287 = vdwg.mxu0
    %v288 = vadd.f32 %v283, %v61
    %289 = vst [vmem:[#allocation8] sm:$0xff] %v288
    // Predicated region
    $region34: #{tpu_custom_call.1} parent=1 // pred_check
      _
    $region35: #{tpu_custom_call.1} parent=1 // pred_check_branch
      %291 = sbr.rel (0) target = $region37
    $region36: #{tpu_custom_call.1} parent=1 // pred_region
      %s293 = ssub.s32 128, 128
      %294 = vsyncadd [#allocation4], %s293
      %s296 = sshll.u32 [#allocation8], 4
      %s297 = int_to_ptr.vmem [resolvable:$true] %s296
      %299 = dma.vmem_to_hbm [thread:$0]  %s297, 128, %s5, [#allocation4]
    $region37: #{tpu_custom_call.1} parent=1 // pred_fallthru
      _
    // Predicated region
    $region38: #{tpu_custom_call.1} parent=1 // pred_check
      _
    $region39: #{tpu_custom_call.1} parent=1 // pred_check_branch
      %301 = sbr.rel (0) target = $region41
    $region40: #{tpu_custom_call.1} parent=1 // pred_region
      %302 = dma.done [#allocation4], 128
    $region41: #{tpu_custom_call.1} parent=1 // pred_fallthru
      _
    %303 = vsyncpa [#allocation3], 1
    %304 = vsyncpa [#allocation6], 1
    %305 = vsyncpa [#allocation4], 1

</llo_original>
